<compile_context>
chip_gen: v7x
topology: tpu7x:2x2x1
jax: 0.10.0
libtpu: 0.0.40
codegen_flags: <defaults>
</compile_context>

<pallas_src>
import jax
import jax.numpy as jnp
from jax.experimental import pallas as pl
from jax.experimental.pallas import tpu as pltpu

# Logical (config-equivalent) model dims — same semantics as the PyTorch module.
STATE_DIM = 16
ACTION_DIM = 4
HIDDEN_UNITS = 32

# Row offsets of each layer's weights inside the packed (80, 32) weight slab.
W1_OFF = 0
W2_OFF = STATE_DIM                      # 16  (sublane aligned)
W3_OFF = STATE_DIM + HIDDEN_UNITS       # 48  (sublane aligned)
W_ROWS = STATE_DIM + 2 * HIDDEN_UNITS   # 80


def actor_kernel(x_ref, w_ref, b_ref, o_ref):
    """Forward for one (B_TILE, STATE_DIM) batch tile; packed params VMEM-resident."""
    x = x_ref[...]                                              # (Bt, 16)

    w1 = w_ref[W1_OFF:W1_OFF + STATE_DIM, :]                    # (16, 32)
    w2 = w_ref[W2_OFF:W2_OFF + HIDDEN_UNITS, :]                 # (32, 32)
    w3 = w_ref[W3_OFF:W3_OFF + HIDDEN_UNITS, :ACTION_DIM]       # (32, 4)

    # layer 1 / layer 2: Linear + Tanh
    h1 = jnp.tanh(
        jnp.dot(x, w1, preferred_element_type=jnp.float32) + b_ref[0:1, :]
    )
    h2 = jnp.tanh(
        jnp.dot(h1, w2, preferred_element_type=jnp.float32) + b_ref[1:2, :]
    )

    # layer 3: Linear + Softmax over the real (unpadded) action lanes.
    logits = (
        jnp.dot(h2, w3, preferred_element_type=jnp.float32)
        + b_ref[2:3, :ACTION_DIM]
    )                                                           # (Bt, 4)

    m = jnp.max(logits, axis=-1, keepdims=True)
    e = jnp.exp(logits - m)
    denom = jnp.sum(e, axis=-1, keepdims=True)
    o_ref[...] = (e * pl.reciprocal(denom, approx=False)).astype(o_ref.dtype)


def _num_tensorcores():
    """2 tiles for 2-TC chips (v7x); 1 tile elsewhere (v5e/v6e have one TC)."""
    try:
        kind = jax.devices()[0].device_kind.lower()
    except Exception:
        return 1
    return 2 if "v7" in kind else 1


def actor_forward(state, packed_params, *, n_tiles=None):
    """Action probabilities, shape (B, ACTION_DIM)."""
    w_all, b_all = packed_params
    B, S = state.shape
    assert S == STATE_DIM

    if n_tiles is None:
        n_tiles = _num_tensorcores()

    # Per-tile rows: multiple of 8 sublanes, batch split evenly across tiles.
    b_tile = max(8, pl.cdiv(B, 8 * n_tiles) * 8)
    Bp = b_tile * n_tiles
    x = state.astype(jnp.float32)
    if Bp != B:
        x = jnp.pad(x, ((0, Bp - B), (0, 0)))

    out = pl.pallas_call(
        actor_kernel,
        out_shape=jax.ShapeDtypeStruct((Bp, ACTION_DIM), jnp.float32),
        grid_spec=pltpu.PrefetchScalarGridSpec(
            num_scalar_prefetch=0,
            grid=(n_tiles,),
            in_specs=[
                pl.BlockSpec((b_tile, STATE_DIM), lambda i: (i, 0)),      # batch tile
                pl.BlockSpec((W_ROWS, HIDDEN_UNITS), lambda i: (0, 0)),   # resident weights
                pl.BlockSpec((3, HIDDEN_UNITS), lambda i: (0, 0)),        # resident biases
            ],
            out_specs=pl.BlockSpec((b_tile, ACTION_DIM), lambda i: (i, 0)),
        ),
        compiler_params=pltpu.CompilerParams(
            dimension_semantics=("parallel",),   # shards batch tiles across TCs on v7x
        ),
    )(x, w_all, b_all)

    return out if Bp == B else out[:B]


def init_params(key):
    """Logical nn.Linear-shaped params, weights stored as (in, out)."""
    ks = jax.random.split(key, 6)

    def linear(kw, kb, fan_in, fan_out):
        # PyTorch default init: U(-1/sqrt(fan_in), 1/sqrt(fan_in))
        bound = 1.0 / jnp.sqrt(jnp.float32(fan_in))
        w = jax.random.uniform(kw, (fan_in, fan_out), jnp.float32, -bound, bound)
        b = jax.random.uniform(kb, (1, fan_out), jnp.float32, -bound, bound)
        return w, b

    w1, b1 = linear(ks[0], ks[1], STATE_DIM, HIDDEN_UNITS)
    w2, b2 = linear(ks[2], ks[3], HIDDEN_UNITS, HIDDEN_UNITS)
    w3, b3 = linear(ks[4], ks[5], HIDDEN_UNITS, ACTION_DIM)
    return (w1, b1, w2, b2, w3, b3)


def pack_params(params):
    """Pack all layers into one (80, 32) weight slab and one (3, 32) bias slab."""
    w1, b1, w2, b2, w3, b3 = params
    w3p = jnp.pad(w3, ((0, 0), (0, HIDDEN_UNITS - ACTION_DIM)))   # (32, 32)
    b3p = jnp.pad(b3, ((0, 0), (0, HIDDEN_UNITS - ACTION_DIM)))   # (1, 32)
    w_all = jnp.concatenate([w1, w2, w3p], axis=0)                # (80, 32)
    b_all = jnp.concatenate([b1, b2, b3p], axis=0)                # (3, 32)
    return w_all, b_all


def actor_forward_ref(state, params):
    """Pure-JAX reference on the logical (unpacked) params."""
    w1, b1, w2, b2, w3, b3 = params
    h1 = jnp.tanh(state @ w1 + b1)
    h2 = jnp.tanh(h1 @ w2 + b2)
    return jax.nn.softmax(h2 @ w3 + b3, axis=-1)


if __name__ == "__main__":
    key = jax.random.PRNGKey(0)
    k_params, k_state = jax.random.split(key)

    params = init_params(k_params)
    packed = pack_params(params)

    BATCH = 64
    state = jax.random.normal(k_state, (BATCH, STATE_DIM), jnp.float32)

    probs = jax.block_until_ready(actor_forward(state, packed))

    ref = actor_forward_ref(state, params)
    assert probs.shape == (BATCH, ACTION_DIM)
    assert jnp.allclose(jnp.sum(probs, axis=-1), 1.0, atol=1e-5)
    assert jnp.allclose(probs, ref, atol=2e-5, rtol=2e-5)

    # TODO(synk): `get_action` (Categorical sample / log_prob / entropy) could be
    # fused in-kernel via pltpu.prng_random_bits + Gumbel-max; kept host-side to
    # preserve forward() semantics.
    print("KERNEL_OK")
</pallas_src>

<mosaic_0001>
module attributes {stable_mosaic.version = 11 : i64} {
  func.func @actor_kernel(%arg0: i32, %arg1: memref<64x16xf32, #tpu.memory_space<vmem>>, %arg2: memref<80x32xf32, #tpu.memory_space<vmem>>, %arg3: memref<3x32xf32, #tpu.memory_space<vmem>>, %arg4: memref<64x4xf32, #tpu.memory_space<vmem>>) attributes {dimension_semantics = [#tpu.dimension_semantics<parallel>], iteration_bounds = array<i64: 1>, scalar_prefetch = 0 : i64, scratch_operands = 0 : i64, tpu.core_type = #tpu.core_type<tc>, window_params = [{transform_indices = @transform_0, window_bounds = array<i64: 64, 16>}, {pipeline_mode = #tpu.pipeline_mode<synchronous>, transform_indices = @transform_1, window_bounds = array<i64: 80, 32>}, {pipeline_mode = #tpu.pipeline_mode<synchronous>, transform_indices = @transform_2, window_bounds = array<i64: 3, 32>}, {transform_indices = @transform_3, window_bounds = array<i64: 64, 4>}]} {
    %c0 = arith.constant 0 : index
    %c0_0 = arith.constant 0 : index
    %0 = vector.load %arg1[%c0, %c0_0] : memref<64x16xf32, #tpu.memory_space<vmem>>, vector<64x16xf32>
    %c0_1 = arith.constant 0 : index
    %c0_2 = arith.constant 0 : index
    %1 = vector.load %arg2[%c0_1, %c0_2] : memref<80x32xf32, #tpu.memory_space<vmem>>, vector<16x32xf32>
    %c16 = arith.constant 16 : index
    %c0_3 = arith.constant 0 : index
    %2 = vector.load %arg2[%c16, %c0_3] : memref<80x32xf32, #tpu.memory_space<vmem>>, vector<32x32xf32>
    %c48 = arith.constant 48 : index
    %c0_4 = arith.constant 0 : index
    %3 = vector.load %arg2[%c48, %c0_4] : memref<80x32xf32, #tpu.memory_space<vmem>>, vector<32x4xf32>
    %cst = arith.constant dense<0.000000e+00> : vector<64x32xf32>
    %4 = tpu.matmul %0, %1, %cst {dimension_numbers = #tpu.dot_dimension_numbers<[1], [0], [0], [1], [0, 0, 1, 1], [], []>} : vector<64x16xf32>, vector<16x32xf32>, vector<64x32xf32> -> vector<64x32xf32>
    %c0_5 = arith.constant 0 : index
    %c0_6 = arith.constant 0 : index
    %5 = vector.load %arg3[%c0_5, %c0_6] : memref<3x32xf32, #tpu.memory_space<vmem>>, vector<1x32xf32>
    %6 = vector.broadcast %5 : vector<1x32xf32> to vector<64x32xf32>
    %7 = arith.addf %4, %6 : vector<64x32xf32>
    %8 = math.tanh %7 : vector<64x32xf32>
    %cst_7 = arith.constant dense<0.000000e+00> : vector<64x32xf32>
    %9 = tpu.matmul %8, %2, %cst_7 {dimension_numbers = #tpu.dot_dimension_numbers<[1], [0], [0], [1], [0, 0, 1, 1], [], []>} : vector<64x32xf32>, vector<32x32xf32>, vector<64x32xf32> -> vector<64x32xf32>
    %c1 = arith.constant 1 : index
    %c0_8 = arith.constant 0 : index
    %10 = vector.load %arg3[%c1, %c0_8] : memref<3x32xf32, #tpu.memory_space<vmem>>, vector<1x32xf32>
    %11 = vector.broadcast %10 : vector<1x32xf32> to vector<64x32xf32>
    %12 = arith.addf %9, %11 : vector<64x32xf32>
    %13 = math.tanh %12 : vector<64x32xf32>
    %cst_9 = arith.constant dense<0.000000e+00> : vector<64x4xf32>
    %14 = tpu.matmul %13, %3, %cst_9 {dimension_numbers = #tpu.dot_dimension_numbers<[1], [0], [0], [1], [0, 0, 1, 1], [], []>} : vector<64x32xf32>, vector<32x4xf32>, vector<64x4xf32> -> vector<64x4xf32>
    %c2 = arith.constant 2 : index
    %c0_10 = arith.constant 0 : index
    %15 = vector.load %arg3[%c2, %c0_10] : memref<3x32xf32, #tpu.memory_space<vmem>>, vector<1x4xf32>
    %16 = vector.broadcast %15 : vector<1x4xf32> to vector<64x4xf32>
    %17 = arith.addf %14, %16 : vector<64x4xf32>
    %cst_11 = arith.constant dense<0xFF800000> : vector<64xf32>
    %18 = vector.multi_reduction <maximumf>, %17, %cst_11 [1] : vector<64x4xf32> to vector<64xf32>
    %19 = vector.shape_cast %18 : vector<64xf32> to vector<64x1xf32>
    %20 = vector.broadcast %19 : vector<64x1xf32> to vector<64x4xf32>
    %21 = arith.subf %17, %20 : vector<64x4xf32>
    %22 = math.exp %21 : vector<64x4xf32>
    %cst_12 = arith.constant dense<0.000000e+00> : vector<64xf32>
    %23 = vector.multi_reduction <add>, %22, %cst_12 [1] : vector<64x4xf32> to vector<64xf32>
    %24 = vector.shape_cast %23 : vector<64xf32> to vector<64x1xf32>
    %25 = tpu.reciprocal %24 : vector<64x1xf32> -> vector<64x1xf32>
    %26 = vector.broadcast %25 : vector<64x1xf32> to vector<64x4xf32>
    %27 = arith.mulf %22, %26 : vector<64x4xf32>
    %c0_13 = arith.constant 0 : index
    %c0_14 = arith.constant 0 : index
    %28 = vector.load %arg4[%c0_13, %c0_14] : memref<64x4xf32, #tpu.memory_space<vmem>>, vector<64x4xf32>
    tpu.vector_store %arg4[%c0_13, %c0_14], %27 {strides = array<i32>} : memref<64x4xf32, #tpu.memory_space<vmem>>, vector<64x4xf32>,
    return
  }
  func.func @transform_0(%arg0: i32) -> (i32, i32) {
    %c0_i32 = arith.constant 0 : i32
    %c0_i32_0 = arith.constant 0 : i32
    return %arg0, %c0_i32 : i32, i32
  }
  func.func @transform_1(%arg0: i32) -> (i32, i32) {
    %c0_i32 = arith.constant 0 : i32
    %c0_i32_0 = arith.constant 0 : i32
    %c0_i32_1 = arith.constant 0 : i32
    return %c0_i32, %c0_i32_0 : i32, i32
  }
  func.func @transform_2(%arg0: i32) -> (i32, i32) {
    %c0_i32 = arith.constant 0 : i32
    %c0_i32_0 = arith.constant 0 : i32
    %c0_i32_1 = arith.constant 0 : i32
    return %c0_i32, %c0_i32_0 : i32, i32
  }
  func.func @transform_3(%arg0: i32) -> (i32, i32) {
    %c0_i32 = arith.constant 0 : i32
    %c0_i32_0 = arith.constant 0 : i32
    return %arg0, %c0_i32 : i32, i32
  }
}

</mosaic_0001>

<llo_original>
// kernel: tpu_custom_call.1
$region0: #{tpu_custom_call.1}
  #allocation0 [shape = 'u32[]', space=smem, size = 0x4, offset = 0x4, fixed_abs, tag = 'smem constant byte address 0x4 - core index']
  #allocation1 [shape = 'u32[144,128]{1,0:T(1,128)}', space=vmem, size = 0x12000, scoped, tag = 'internal scratch']
  %s0 = inlined_call_operand.vmem [shape: f32[64,16], index: 0, kind: input, shape index: {}]
  %s1 = inlined_call_operand.vmem [shape: f32[80,32], index: 1, kind: input, shape index: {}]
  %s2 = inlined_call_operand.vmem [shape: f32[3,32], index: 2, kind: input, shape index: {}]
  %s3 = inlined_call_operand.vmem [shape: f32[64,4], index: 3, kind: output, shape index: {}]
  %s4 = sld [smem:[#allocation0]]
  $region22: #{tpu_custom_call.1} parent=0
    _
  %s6 = ssub.s32 1, %s4
  %s7 = scalar_select 0, %s6, %s4
  // Predicated region
  $region2: #{tpu_custom_call.1} parent=0 // pred_check
    _
  $region3: #{tpu_custom_call.1} parent=0 // pred_check_branch
    %9 = sbr.rel (0) target = $region5
  $region4: #{tpu_custom_call.1} parent=0 // pred_region
    _
  $region5: #{tpu_custom_call.1} parent=0 // pred_fallthru
    _
  // Predicated region
  $region6: #{tpu_custom_call.1} parent=0 // pred_check
    _
  $region7: #{tpu_custom_call.1} parent=0 // pred_check_branch
    %11 = sbr.rel (0) target = $region9
  $region8: #{tpu_custom_call.1} parent=0 // pred_region
    _
  $region9: #{tpu_custom_call.1} parent=0 // pred_fallthru
    _
  // Predicated region
  $region10: #{tpu_custom_call.1} parent=0 // pred_check
    _
  $region11: #{tpu_custom_call.1} parent=0 // pred_check_branch
    %13 = sbr.rel (0) target = $region13
  $region12: #{tpu_custom_call.1} parent=0 // pred_region
    _
  $region13: #{tpu_custom_call.1} parent=0 // pred_fallthru
    _
  %v14 = vld [vmem:[%s0] sm:$0xff]
  %v15 = vld [vmem:[%s0 + $0x8] sm:$0xff]
  %v16 = vld [vmem:[%s0 + $0x10] sm:$0xff]
  %v17 = vld [vmem:[%s0 + $0x18] sm:$0xff]
  %v18 = vld [vmem:[%s0 + $0x20] sm:$0xff]
  %v19 = vld [vmem:[%s0 + $0x28] sm:$0xff]
  %v20 = vld [vmem:[%s0 + $0x30] sm:$0xff]
  %v21 = vld [vmem:[%s0 + $0x38] sm:$0xff]
  %v22 = vld [vmem:[%s1] sm:$0xff]
  %v23 = vld [vmem:[%s1 + $0x8] sm:$0xff]
  %v24 = vld [vmem:[%s1 + $0x10] sm:$0xff]
  %v25 = vld [vmem:[%s1 + $0x18] sm:$0xff]
  %v26 = vld [vmem:[%s1 + $0x20] sm:$0xff]
  %v27 = vld [vmem:[%s1 + $0x28] sm:$0xff]
  %v28 = vld [vmem:[%s1 + $0x30] sm:$0xff]
  %v29 = vld [vmem:[%s1 + $0x38] sm:$0xff]
  %v30 = vld [vmem:[%s1 + $0x40] sm:$0xff]
  %v31 = vld [vmem:[%s1 + $0x48] sm:$0xff]
  %v32 = vld [vmem:[%s2] sm:$0x1]
  %v33 = vlaneseq
  %v34 = vshrl.u32 %v33, 7
  %v35 = vsub.s32 0, %v34
  %v36 = vrot.slane %v32, %v35
  %vm37 = vcmask 130048
  %v39 = vsel %vm37, %v14, 0
  %v42 = vsel %vm37, %v15, 0
  %v45 = vsel %vm37, %v16, 0
  %v48 = vsel %vm37, %v17, 0
  %v51 = vsel %vm37, %v18, 0
  %v54 = vsel %vm37, %v19, 0
  %v57 = vsel %vm37, %v20, 0
  %v60 = vsel %vm37, %v21, 0
  %62 = vmatprep.subr.mxu0 0.0
  %63 = vmatpush1.msra.mxu0 %v22
  %64 = vmatprep.subr.mxu0 0.0
  %65 = vmatpush1.msra.mxu0 %v23
  %66 = vmatprep.subr.mxu0 0.0
  %67 = vmatpush1.msra.mxu0 0.0
  %68 = vmatprep.subr.mxu0 0.0
  %69 = vmatpush1.msra.mxu0 0.0
  %70 = vmatprep.subr.mxu0 0.0
  %71 = vmatpush1.msra.mxu0 0.0
  %72 = vmatprep.subr.mxu0 0.0
  %73 = vmatpush1.msra.mxu0 0.0
  %74 = vmatprep.subr.mxu0 0.0
  %75 = vmatpush1.msra.mxu0 0.0
  %76 = vmatprep.subr.mxu0 0.0
  %77 = vmatpush1.msra.mxu0 0.0
  %78 = vmatprep.subr.mxu0 0.0
  %79 = vmatpush1.msra.mxu0 0.0
  %80 = vmatprep.subr.mxu0 0.0
  %81 = vmatpush1.msra.mxu0 0.0
  %82 = vmatprep.subr.mxu0 0.0
  %83 = vmatpush1.msra.mxu0 0.0
  %84 = vmatprep.subr.mxu0 0.0
  %85 = vmatpush1.msra.mxu0 0.0
  %86 = vmatprep.subr.mxu0 0.0
  %87 = vmatpush1.msra.mxu0 0.0
  %88 = vmatprep.subr.mxu0 0.0
  %89 = vmatpush1.msra.mxu0 0.0
  %90 = vmatprep.subr.mxu0 0.0
  %91 = vmatpush1.msra.mxu0 0.0
  %92 = vmatprep.subr.mxu0 0.0
  %93 = vmatpush1.msra.mxu0 0.0
  %94 = vmatprep.subr.mxu0 0.0
  %95 = vmatpush1.msra.mxu0 0.0
  %96 = vmatprep.subr.mxu0 0.0
  %97 = vmatpush1.msra.mxu0 0.0
  %98 = vmatprep.subr.mxu0 0.0
  %99 = vmatpush1.msra.mxu0 0.0
  %100 = vmatprep.subr.mxu0 0.0
  %101 = vmatpush1.msra.mxu0 0.0
  %102 = vmatprep.subr.mxu0 0.0
  %103 = vmatpush1.msra.mxu0 0.0
  %104 = vmatprep.subr.mxu0 0.0
  %105 = vmatpush1.msra.mxu0 0.0
  %106 = vmatprep.subr.mxu0 0.0
  %107 = vmatpush1.msra.mxu0 0.0
  %108 = vmatprep.subr.mxu0 0.0
  %109 = vmatpush1.msra.mxu0 0.0
  %110 = vmatprep.subr.mxu0 0.0
  %111 = vmatpush1.msra.mxu0 0.0
  %112 = vmatprep.subr.mxu0 0.0
  %113 = vmatpush1.msra.mxu0 0.0
  %114 = vmatprep.subr.mxu0 0.0
  %115 = vmatpush1.msra.mxu0 0.0
  %116 = vmatprep.subr.mxu0 0.0
  %117 = vmatpush1.msra.mxu0 0.0
  %118 = vmatprep.subr.mxu0 0.0
  %119 = vmatpush1.msra.mxu0 0.0
  %120 = vmatprep.subr.mxu0 0.0
  %121 = vmatpush1.msra.mxu0 0.0
  %122 = vmatprep.subr.mxu0 0.0
  %123 = vmatpush1.msra.mxu0 0.0
  %124 = vmatprep.subr.mxu0 0.0
  %125 = vmatpush1.msra.mxu0 0.0
  %126 = vmatprep.mubr.f32.mxu0 0.0
  %127 = vmatmul.mubr.f32.gmra.mrb[0].mxu0 %v39
  %v128 = vpop.f32.mrb[0].mxu0
  %v129 = vadd.f32 %v36, %v128
  %v130 = vpop.f32.mrb[0].mxu0
  %131 = vmatprep.mubr.f32.mxu0 0.0
  %132 = vmatmul.mubr.f32.gmra.mrb[0].mxu0 %v42
  %v133 = vpop.f32.mrb[0].mxu0
  %v134 = vadd.f32 %v36, %v133
  %v135 = vpop.f32.mrb[0].mxu0
  %136 = vmatprep.mubr.f32.mxu0 0.0
  %137 = vmatmul.mubr.f32.gmra.mrb[0].mxu0 %v45
  %v138 = vpop.f32.mrb[0].mxu0
  %v139 = vadd.f32 %v36, %v138
  %v140 = vpop.f32.mrb[0].mxu0
  %141 = vmatprep.mubr.f32.mxu0 0.0
  %142 = vmatmul.mubr.f32.gmra.mrb[0].mxu0 %v48
  %v143 = vpop.f32.mrb[0].mxu0
  %v144 = vadd.f32 %v36, %v143
  %v145 = vpop.f32.mrb[0].mxu0
  %146 = vmatprep.mubr.f32.mxu0 0.0
  %147 = vmatmul.mubr.f32.gmra.mrb[0].mxu0 %v51
  %v148 = vpop.f32.mrb[0].mxu0
  %v149 = vadd.f32 %v36, %v148
  %v150 = vpop.f32.mrb[0].mxu0
  %151 = vmatprep.mubr.f32.mxu0 0.0
  %152 = vmatmul.mubr.f32.gmra.mrb[0].mxu0 %v54
  %v153 = vpop.f32.mrb[0].mxu0
  %v154 = vadd.f32 %v36, %v153
  %v155 = vpop.f32.mrb[0].mxu0
  %156 = vmatprep.mubr.f32.mxu0 0.0
  %157 = vmatmul.mubr.f32.gmra.mrb[0].mxu0 %v57
  %v158 = vpop.f32.mrb[0].mxu0
  %v159 = vadd.f32 %v36, %v158
  %v160 = vpop.f32.mrb[0].mxu0
  %161 = vmatprep.mubr.f32.mxu0 0.0
  %162 = vmatmul.mubr.f32.gmra.mrb[0].mxu0 %v60
  %v163 = vpop.f32.mrb[0].mxu0
  %v164 = vadd.f32 %v36, %v163
  %v165 = vpop.f32.mrb[0].mxu0
  %166 = vdwg.mxu0
  %v167 = vtanh.pop %v129
  %v168 = vtanh.pop %v134
  %v169 = vtanh.pop %v139
  %v170 = vtanh.pop %v144
  %v171 = vtanh.pop %v149
  %v172 = vtanh.pop %v154
  %v173 = vtanh.pop %v159
  %v174 = vtanh.pop %v164
  %v175 = vld [vmem:[%s2 + $0x1] sm:$0x1]
  %v176 = vlaneseq
  %v177 = vshrl.u32 %v176, 7
  %v178 = vsub.s32 0, %v177
  %v179 = vrot.slane %v175, %v178
  %vm180 = vcmask 261120
  %v182 = vsel %vm180, %v167, 0
  %v185 = vsel %vm180, %v168, 0
  %v188 = vsel %vm180, %v169, 0
  %v191 = vsel %vm180, %v170, 0
  %v194 = vsel %vm180, %v171, 0
  %v197 = vsel %vm180, %v172, 0
  %v200 = vsel %vm180, %v173, 0
  %v203 = vsel %vm180, %v174, 0
  %205 = vmatprep.subr.mxu0 0.0
  %206 = vmatpush1.msra.mxu0 %v24
  %207 = vmatprep.subr.mxu0 0.0
  %208 = vmatpush1.msra.mxu0 %v25
  %209 = vmatprep.subr.mxu0 0.0
  %210 = vmatpush1.msra.mxu0 %v26
  %211 = vmatprep.subr.mxu0 0.0
  %212 = vmatpush1.msra.mxu0 %v27
  %213 = vmatprep.subr.mxu0 0.0
  %214 = vmatpush1.msra.mxu0 0.0
  %215 = vmatprep.subr.mxu0 0.0
  %216 = vmatpush1.msra.mxu0 0.0
  %217 = vmatprep.subr.mxu0 0.0
  %218 = vmatpush1.msra.mxu0 0.0
  %219 = vmatprep.subr.mxu0 0.0
  %220 = vmatpush1.msra.mxu0 0.0
  %221 = vmatprep.subr.mxu0 0.0
  %222 = vmatpush1.msra.mxu0 0.0
  %223 = vmatprep.subr.mxu0 0.0
  %224 = vmatpush1.msra.mxu0 0.0
  %225 = vmatprep.subr.mxu0 0.0
  %226 = vmatpush1.msra.mxu0 0.0
  %227 = vmatprep.subr.mxu0 0.0
  %228 = vmatpush1.msra.mxu0 0.0
  %229 = vmatprep.subr.mxu0 0.0
  %230 = vmatpush1.msra.mxu0 0.0
  %231 = vmatprep.subr.mxu0 0.0
  %232 = vmatpush1.msra.mxu0 0.0
  %233 = vmatprep.subr.mxu0 0.0
  %234 = vmatpush1.msra.mxu0 0.0
  %235 = vmatprep.subr.mxu0 0.0
  %236 = vmatpush1.msra.mxu0 0.0
  %237 = vmatprep.subr.mxu0 0.0
  %238 = vmatpush1.msra.mxu0 0.0
  %239 = vmatprep.subr.mxu0 0.0
  %240 = vmatpush1.msra.mxu0 0.0
  %241 = vmatprep.subr.mxu0 0.0
  %242 = vmatpush1.msra.mxu0 0.0
  %243 = vmatprep.subr.mxu0 0.0
  %244 = vmatpush1.msra.mxu0 0.0
  %245 = vmatprep.subr.mxu0 0.0
  %246 = vmatpush1.msra.mxu0 0.0
  %247 = vmatprep.subr.mxu0 0.0
  %248 = vmatpush1.msra.mxu0 0.0
  %249 = vmatprep.subr.mxu0 0.0
  %250 = vmatpush1.msra.mxu0 0.0
  %251 = vmatprep.subr.mxu0 0.0
  %252 = vmatpush1.msra.mxu0 0.0
  %253 = vmatprep.subr.mxu0 0.0
  %254 = vmatpush1.msra.mxu0 0.0
  %255 = vmatprep.subr.mxu0 0.0
  %256 = vmatpush1.msra.mxu0 0.0
  %257 = vmatprep.subr.mxu0 0.0
  %258 = vmatpush1.msra.mxu0 0.0
  %259 = vmatprep.subr.mxu0 0.0
  %260 = vmatpush1.msra.mxu0 0.0
  %261 = vmatprep.subr.mxu0 0.0
  %262 = vmatpush1.msra.mxu0 0.0
  %263 = vmatprep.subr.mxu0 0.0
  %264 = vmatpush1.msra.mxu0 0.0
  %265 = vmatprep.subr.mxu0 0.0
  %266 = vmatpush1.msra.mxu0 0.0
  %267 = vmatprep.subr.mxu0 0.0
  %268 = vmatpush1.msra.mxu0 0.0
  %269 = vmatprep.mubr.f32.mxu0 0.0
  %270 = vmatmul.mubr.f32.gmra.mrb[0].mxu0 %v182
  %v271 = vpop.f32.mrb[0].mxu0
  %v272 = vadd.f32 %v179, %v271
  %v273 = vpop.f32.mrb[0].mxu0
  %274 = vmatprep.mubr.f32.mxu0 0.0
  %275 = vmatmul.mubr.f32.gmra.mrb[0].mxu0 %v185
  %v276 = vpop.f32.mrb[0].mxu0
  %v277 = vadd.f32 %v179, %v276
  %v278 = vpop.f32.mrb[0].mxu0
  %279 = vmatprep.mubr.f32.mxu0 0.0
  %280 = vmatmul.mubr.f32.gmra.mrb[0].mxu0 %v188
  %v281 = vpop.f32.mrb[0].mxu0
  %v282 = vadd.f32 %v179, %v281
  %v283 = vpop.f32.mrb[0].mxu0
  %284 = vmatprep.mubr.f32.mxu0 0.0
  %285 = vmatmul.mubr.f32.gmra.mrb[0].mxu0 %v191
  %v286 = vpop.f32.mrb[0].mxu0
  %v287 = vadd.f32 %v179, %v286
  %v288 = vpop.f32.mrb[0].mxu0
  %289 = vmatprep.mubr.f32.mxu0 0.0
  %290 = vmatmul.mubr.f32.gmra.mrb[0].mxu0 %v194
  %v291 = vpop.f32.mrb[0].mxu0
  %v292 = vadd.f32 %v179, %v291
  %v293 = vpop.f32.mrb[0].mxu0
  %294 = vmatprep.mubr.f32.mxu0 0.0
  %295 = vmatmul.mubr.f32.gmra.mrb[0].mxu0 %v197
  %v296 = vpop.f32.mrb[0].mxu0
  %v297 = vadd.f32 %v179, %v296
  %v298 = vpop.f32.mrb[0].mxu0
  %299 = vmatprep.mubr.f32.mxu0 0.0
  %300 = vmatmul.mubr.f32.gmra.mrb[0].mxu0 %v200
  %v301 = vpop.f32.mrb[0].mxu0
  %v302 = vadd.f32 %v179, %v301
  %v303 = vpop.f32.mrb[0].mxu0
  %304 = vmatprep.mubr.f32.mxu0 0.0
  %305 = vmatmul.mubr.f32.gmra.mrb[0].mxu0 %v203
  %v306 = vpop.f32.mrb[0].mxu0
  %v307 = vadd.f32 %v179, %v306
  %v308 = vpop.f32.mrb[0].mxu0
  %309 = vdwg.mxu0
  %v310 = vtanh.pop %v272
  %v311 = vtanh.pop %v277
  %v312 = vtanh.pop %v282
  %v313 = vtanh.pop %v287
  %v314 = vtanh.pop %v292
  %v315 = vtanh.pop %v297
  %v316 = vtanh.pop %v302
  %v317 = vtanh.pop %v307
  %v318 = vld [vmem:[%s2 + $0x2] sm:$0x1]
  %v319 = vlaneseq
  %v320 = vshrl.u32 %v319, 7
  %v321 = vsub.s32 0, %v320
  %v322 = vrot.slane %v318, %v321
  %v324 = vsel %vm180, %v310, 0
  %v327 = vsel %vm180, %v311, 0
  %v330 = vsel %vm180, %v312, 0
  %v333 = vsel %vm180, %v313, 0
  %v336 = vsel %vm180, %v314, 0
  %v339 = vsel %vm180, %v315, 0
  %v342 = vsel %vm180, %v316, 0
  %v345 = vsel %vm180, %v317, 0
  %347 = vmatprep.subr.mxu0 0.0
  %348 = vmatpush1.msra.mxu0 %v28
  %349 = vmatprep.subr.mxu0 0.0
  %350 = vmatpush1.msra.mxu0 %v29
  %351 = vmatprep.subr.mxu0 0.0
  %352 = vmatpush1.msra.mxu0 %v30
  %353 = vmatprep.subr.mxu0 0.0
  %354 = vmatpush1.msra.mxu0 %v31
  %355 = vmatprep.subr.mxu0 0.0
  %356 = vmatpush1.msra.mxu0 0.0
  %357 = vmatprep.subr.mxu0 0.0
  %358 = vmatpush1.msra.mxu0 0.0
  %359 = vmatprep.subr.mxu0 0.0
  %360 = vmatpush1.msra.mxu0 0.0
  %361 = vmatprep.subr.mxu0 0.0
  %362 = vmatpush1.msra.mxu0 0.0
  %363 = vmatprep.subr.mxu0 0.0
  %364 = vmatpush1.msra.mxu0 0.0
  %365 = vmatprep.subr.mxu0 0.0
  %366 = vmatpush1.msra.mxu0 0.0
  %367 = vmatprep.subr.mxu0 0.0
  %368 = vmatpush1.msra.mxu0 0.0
  %369 = vmatprep.subr.mxu0 0.0
  %370 = vmatpush1.msra.mxu0 0.0
  %371 = vmatprep.subr.mxu0 0.0
  %372 = vmatpush1.msra.mxu0 0.0
  %373 = vmatprep.subr.mxu0 0.0
  %374 = vmatpush1.msra.mxu0 0.0
  %375 = vmatprep.subr.mxu0 0.0
  %376 = vmatpush1.msra.mxu0 0.0
  %377 = vmatprep.subr.mxu0 0.0
  %378 = vmatpush1.msra.mxu0 0.0
  %379 = vmatprep.subr.mxu0 0.0
  %380 = vmatpush1.msra.mxu0 0.0
  %381 = vmatprep.subr.mxu0 0.0
  %382 = vmatpush1.msra.mxu0 0.0
  %383 = vmatprep.subr.mxu0 0.0
  %384 = vmatpush1.msra.mxu0 0.0
  %385 = vmatprep.subr.mxu0 0.0
  %386 = vmatpush1.msra.mxu0 0.0
  %387 = vmatprep.subr.mxu0 0.0
  %388 = vmatpush1.msra.mxu0 0.0
  %389 = vmatprep.subr.mxu0 0.0
  %390 = vmatpush1.msra.mxu0 0.0
  %391 = vmatprep.subr.mxu0 0.0
  %392 = vmatpush1.msra.mxu0 0.0
  %393 = vmatprep.subr.mxu0 0.0
  %394 = vmatpush1.msra.mxu0 0.0
  %395 = vmatprep.subr.mxu0 0.0
  %396 = vmatpush1.msra.mxu0 0.0
  %397 = vmatprep.subr.mxu0 0.0
  %398 = vmatpush1.msra.mxu0 0.0
  %399 = vmatprep.subr.mxu0 0.0
  %400 = vmatpush1.msra.mxu0 0.0
  %401 = vmatprep.subr.mxu0 0.0
  %402 = vmatpush1.msra.mxu0 0.0
  %403 = vmatprep.subr.mxu0 0.0
  %404 = vmatpush1.msra.mxu0 0.0
  %405 = vmatprep.subr.mxu0 0.0
  %406 = vmatpush1.msra.mxu0 0.0
  %407 = vmatprep.subr.mxu0 0.0
  %408 = vmatpush1.msra.mxu0 0.0
  %409 = vmatprep.subr.mxu0 0.0
  %410 = vmatpush1.msra.mxu0 0.0
  %411 = vmatprep.mubr.f32.mxu0 0.0
  %412 = vmatmul.mubr.f32.gmra.mrb[0].mxu0 %v324
  %v413 = vpop.f32.mrb[0].mxu0
  %v414 = vadd.f32 %v322, %v413
  %v415 = vpop.f32.mrb[0].mxu0
  %416 = vmatprep.mubr.f32.mxu0 0.0
  %417 = vmatmul.mubr.f32.gmra.mrb[0].mxu0 %v327
  %v418 = vpop.f32.mrb[0].mxu0
  %v419 = vadd.f32 %v322, %v418
  %v420 = vpop.f32.mrb[0].mxu0
  %421 = vmatprep.mubr.f32.mxu0 0.0
  %422 = vmatmul.mubr.f32.gmra.mrb[0].mxu0 %v330
  %v423 = vpop.f32.mrb[0].mxu0
  %v424 = vadd.f32 %v322, %v423
  %v425 = vpop.f32.mrb[0].mxu0
  %426 = vmatprep.mubr.f32.mxu0 0.0
  %427 = vmatmul.mubr.f32.gmra.mrb[0].mxu0 %v333
  %v428 = vpop.f32.mrb[0].mxu0
  %v429 = vadd.f32 %v322, %v428
  %v430 = vpop.f32.mrb[0].mxu0
  %431 = vmatprep.mubr.f32.mxu0 0.0
  %432 = vmatmul.mubr.f32.gmra.mrb[0].mxu0 %v336
  %v433 = vpop.f32.mrb[0].mxu0
  %v434 = vadd.f32 %v322, %v433
  %v435 = vpop.f32.mrb[0].mxu0
  %436 = vmatprep.mubr.f32.mxu0 0.0
  %437 = vmatmul.mubr.f32.gmra.mrb[0].mxu0 %v339
  %v438 = vpop.f32.mrb[0].mxu0
  %v439 = vadd.f32 %v322, %v438
  %v440 = vpop.f32.mrb[0].mxu0
  %441 = vmatprep.mubr.f32.mxu0 0.0
  %442 = vmatmul.mubr.f32.gmra.mrb[0].mxu0 %v342
  %v443 = vpop.f32.mrb[0].mxu0
  %v444 = vadd.f32 %v322, %v443
  %v445 = vpop.f32.mrb[0].mxu0
  %446 = vmatprep.mubr.f32.mxu0 0.0
  %447 = vmatmul.mubr.f32.gmra.mrb[0].mxu0 %v345
  %v448 = vpop.f32.mrb[0].mxu0
  %v449 = vadd.f32 %v322, %v448
  %v450 = vpop.f32.mrb[0].mxu0
  %451 = vdwg.mxu0
  %vm452 = vcmask 31744
  %v453 = vsel %vm452, %v414, -inf
  %454 = vmax.xlane.f32.xlu0 %v453
  %v455 = vpop.xlane.xlu0 %454
  %v456 = vsel %vm452, %v419, -inf
  %457 = vmax.xlane.f32.xlu0 %v456
  %v458 = vpop.xlane.xlu0 %457
  %v459 = vsel %vm452, %v424, -inf
  %460 = vmax.xlane.f32.xlu0 %v459
  %v461 = vpop.xlane.xlu0 %460
  %v462 = vsel %vm452, %v429, -inf
  %463 = vmax.xlane.f32.xlu0 %v462
  %v464 = vpop.xlane.xlu0 %463
  %v465 = vsel %vm452, %v434, -inf
  %466 = vmax.xlane.f32.xlu0 %v465
  %v467 = vpop.xlane.xlu0 %466
  %v468 = vsel %vm452, %v439, -inf
  %469 = vmax.xlane.f32.xlu0 %v468
  %v470 = vpop.xlane.xlu0 %469
  %v471 = vsel %vm452, %v444, -inf
  %472 = vmax.xlane.f32.xlu0 %v471
  %v473 = vpop.xlane.xlu0 %472
  %v474 = vsel %vm452, %v449, -inf
  %475 = vmax.xlane.f32.xlu0 %v474
  %v476 = vpop.xlane.xlu0 %475
  %v477 = vsub.f32 %v414, %v455
  %v478 = vsub.f32 %v419, %v458
  %v479 = vsub.f32 %v424, %v461
  %v480 = vsub.f32 %v429, %v464
  %v481 = vsub.f32 %v434, %v467
  %v482 = vsub.f32 %v439, %v470
  %v483 = vsub.f32 %v444, %v473
  %v484 = vsub.f32 %v449, %v476
  %v485 = vmul.f32 %v477, 1.442695
  %v486 = vpow.pop %v485
  %v487 = vmul.f32 %v478, 1.442695
  %v488 = vpow.pop %v487
  %v489 = vmul.f32 %v479, 1.442695
  %v490 = vpow.pop %v489
  %v491 = vmul.f32 %v480, 1.442695
  %v492 = vpow.pop %v491
  %v493 = vmul.f32 %v481, 1.442695
  %v494 = vpow.pop %v493
  %v495 = vmul.f32 %v482, 1.442695
  %v496 = vpow.pop %v495
  %v497 = vmul.f32 %v483, 1.442695
  %v498 = vpow.pop %v497
  %v499 = vmul.f32 %v484, 1.442695
  %v500 = vpow.pop %v499
  %v501 = vsel %vm452, %v486, 0.0
  %502 = vadd.xlane.f32.xlu0 %v501
  %v503 = vpop.xlane.xlu0 %502
  %v504 = vsel %vm452, %v488, 0.0
  %505 = vadd.xlane.f32.xlu0 %v504
  %v506 = vpop.xlane.xlu0 %505
  %v507 = vsel %vm452, %v490, 0.0
  %508 = vadd.xlane.f32.xlu0 %v507
  %v509 = vpop.xlane.xlu0 %508
  %v510 = vsel %vm452, %v492, 0.0
  %511 = vadd.xlane.f32.xlu0 %v510
  %v512 = vpop.xlane.xlu0 %511
  %v513 = vsel %vm452, %v494, 0.0
  %514 = vadd.xlane.f32.xlu0 %v513
  %v515 = vpop.xlane.xlu0 %514
  %v516 = vsel %vm452, %v496, 0.0
  %517 = vadd.xlane.f32.xlu0 %v516
  %v518 = vpop.xlane.xlu0 %517
  %v519 = vsel %vm452, %v498, 0.0
  %520 = vadd.xlane.f32.xlu0 %v519
  %v521 = vpop.xlane.xlu0 %520
  %v522 = vsel %vm452, %v500, 0.0
  %523 = vadd.xlane.f32.xlu0 %v522
  %v524 = vpop.xlane.xlu0 %523
  %v525 = vrcp.pop %v503
  %v526 = vrcp.pop %v506
  %v527 = vrcp.pop %v509
  %v528 = vrcp.pop %v512
  %v529 = vrcp.pop %v515
  %v530 = vrcp.pop %v518
  %v531 = vrcp.pop %v521
  %v532 = vrcp.pop %v524
  %v533 = vmul.f32 %v486, %v525
  %v534 = vmul.f32 %v488, %v526
  %v535 = vmul.f32 %v490, %v527
  %v536 = vmul.f32 %v492, %v528
  %v537 = vmul.f32 %v494, %v529
  %v538 = vmul.f32 %v496, %v530
  %v539 = vmul.f32 %v498, %v531
  %v540 = vmul.f32 %v500, %v532
  %541 = vst.msk [vmem:[%s3] sm:$0xff] %vm452, %v533
  %542 = vst.msk [vmem:[%s3 + $0x8] sm:$0xff] %vm452, %v534
  %543 = vst.msk [vmem:[%s3 + $0x10] sm:$0xff] %vm452, %v535
  %544 = vst.msk [vmem:[%s3 + $0x18] sm:$0xff] %vm452, %v536
  %545 = vst.msk [vmem:[%s3 + $0x20] sm:$0xff] %vm452, %v537
  %546 = vst.msk [vmem:[%s3 + $0x28] sm:$0xff] %vm452, %v538
  %547 = vst.msk [vmem:[%s3 + $0x30] sm:$0xff] %vm452, %v539
  %548 = vst.msk [vmem:[%s3 + $0x38] sm:$0xff] %vm452, %v540
  // Predicated region
  $region14: #{tpu_custom_call.1} parent=0 // pred_check
    _
  $region15: #{tpu_custom_call.1} parent=0 // pred_check_branch
    %550 = sbr.rel (0) target = $region17
  $region16: #{tpu_custom_call.1} parent=0 // pred_region
    _
  $region17: #{tpu_custom_call.1} parent=0 // pred_fallthru
    _
  // Predicated region
  $region18: #{tpu_custom_call.1} parent=0 // pred_check
    _
  $region19: #{tpu_custom_call.1} parent=0 // pred_check_branch
    %552 = sbr.rel (0) target = $region21
  $region20: #{tpu_custom_call.1} parent=0 // pred_region
    _
  $region21: #{tpu_custom_call.1} parent=0 // pred_fallthru
    _

</llo_original>
